<compile_context>
chip_gen: v6e
topology: v6e:2x2x1
jax: 0.10.0
libtpu: 0.0.40
codegen_flags: <defaults>
</compile_context>

<pallas_src>
import functools

import jax
import jax.numpy as jnp
from jax.experimental import pallas as pl
from jax.experimental.pallas import tpu as pltpu


def _round_up(x, m):
    return (x + m - 1) // m * m


# ---------------------------------------------------------------- kernels ---

def _embed_kernel(x_ref, w1t_ref, b1_ref, o_ref):
    # o = x @ w1t + b1   (bf16 inputs, f32 accumulate)
    o_ref[...] = (
        jnp.dot(x_ref[...], w1t_ref[...], preferred_element_type=jnp.float32)
        + b1_ref[...]
    )


def _loss_kernel(x_ref, w1t_ref, b1_ref, w2t_ref, b2_ref, lab_ref, out_ref,
                 h_ref, m_ref, l_ref, p_ref, *, wt, w_valid):
    """Grid = (batch_tiles, vocab_tiles). Online-LSE over the vocab axis."""
    j = pl.program_id(1)

    @pl.when(j == 0)
    def _init():
        # Hidden layer computed once per batch tile, reused for every vocab tile.
        h_ref[...] = (
            jnp.dot(x_ref[...], w1t_ref[...], preferred_element_type=jnp.float32)
            + b1_ref[...]
        )
        m_ref[...] = jnp.full_like(m_ref, -1e30)
        l_ref[...] = jnp.zeros_like(l_ref)
        p_ref[...] = jnp.zeros_like(p_ref)

    # logits tile: (bt, wt), f32 accumulate from bf16 MXU inputs.
    logits = (
        jnp.dot(h_ref[...].astype(w2t_ref.dtype), w2t_ref[...],
                preferred_element_type=jnp.float32)
        + b2_ref[...]
    )
    col = j * wt + jax.lax.broadcasted_iota(jnp.int32, logits.shape, 1)
    # Mask vocab-padding columns out of the softmax.
    logits = jnp.where(col < w_valid, logits, -1e30)

    # Online log-sum-exp update.
    m_prev = m_ref[...]
    m_new = jnp.maximum(m_prev, jnp.max(logits, axis=-1, keepdims=True))
    p = jnp.exp(logits - m_new)
    l_ref[...] = jnp.exp(m_prev - m_new) * l_ref[...] + jnp.sum(p, axis=-1,
                                                                keepdims=True)
    m_ref[...] = m_new

    # Accumulate the picked (label) logit; exactly one vocab tile contains it.
    lab = lab_ref[...]                                   # (bt, 1) int32
    p_ref[...] += jnp.sum(jnp.where(col == lab, logits, 0.0),
                          axis=-1, keepdims=True)

    @pl.when(j == pl.num_programs(1) - 1)
    def _finalize():
        per_ex = m_ref[...] + jnp.log(l_ref[...]) - p_ref[...]   # (bt, 1)
        # Lane-dense (bt, 128) store; wrapper reads column 0.
        out_ref[...] = jnp.broadcast_to(per_ex, out_ref.shape)


# --------------------------------------------------------------- wrappers ---

def word2vec_embed(x, w1, b1, *, bt=128):
    """label=None branch: returns embeddings (B, embedding_num), f32."""
    B, W = x.shape
    E = w1.shape[0]
    Wp = _round_up(W, 128)          # input-feature (K) dim, padded
    Ep = _round_up(E, 128)          # embedding (N) dim, padded -> lane-dense out
    Bp = _round_up(B, bt)
    n_bt = Bp // bt

    xp = jnp.pad(x, ((0, Bp - B), (0, Wp - W))).astype(jnp.bfloat16)
    w1t = jnp.pad(w1.T, ((0, Wp - W), (0, Ep - E))).astype(jnp.bfloat16)
    b1p = jnp.pad(b1.astype(jnp.float32), (0, Ep - E)).reshape(1, Ep)

    out = pl.pallas_call(
        _embed_kernel,
        out_shape=jax.ShapeDtypeStruct((Bp, Ep), jnp.float32),
        grid=(n_bt,),
        in_specs=[
            pl.BlockSpec((bt, Wp), lambda i: (i, 0)),
            pl.BlockSpec((Wp, Ep), lambda i: (0, 0)),
            pl.BlockSpec((1, Ep), lambda i: (0, 0)),
        ],
        out_specs=pl.BlockSpec((bt, Ep), lambda i: (i, 0)),
        compiler_params=pltpu.CompilerParams(
            dimension_semantics=("parallel",),
            vmem_limit_bytes=64 * 1024 * 1024,
        ),
        cost_estimate=pl.CostEstimate(
            flops=2 * Bp * Wp * Ep,
            transcendentals=0,
            bytes_accessed=xp.size * 2 + w1t.size * 2 + b1p.size * 4
            + Bp * Ep * 4,
        ),
    )(xp, w1t, b1p)
    return out[:B, :E]


def word2vec_loss(x, label, w1, b1, w2, b2, *, bt=128, wt=512):
    """label branch: returns scalar cross-entropy loss (mean reduction)."""
    B, W = x.shape
    E = w1.shape[0]
    Wp_in = _round_up(W, 128)             # K dim of first matmul
    Ep = _round_up(E, 128)                # hidden dim (padded with zeros)
    wt = min(wt, _round_up(W, 128))       # vocab tile (multiple of 128/256)
    Wp_out = _round_up(W, wt)             # padded vocab / logits dim
    Bp = _round_up(B, bt)
    n_bt, n_wt = Bp // bt, Wp_out // wt

    # TODO(synk): for very large word_size, also tile the input-feature (K)
    # dim of the first matmul instead of keeping full (bt, Wp_in) x tiles.
    xp = jnp.pad(x, ((0, Bp - B), (0, Wp_in - W))).astype(jnp.bfloat16)
    w1t = jnp.pad(w1.T, ((0, Wp_in - W), (0, Ep - E))).astype(jnp.bfloat16)
    b1p = jnp.pad(b1.astype(jnp.float32), (0, Ep - E)).reshape(1, Ep)
    w2t = jnp.pad(w2.T, ((0, Ep - E), (0, Wp_out - W))).astype(jnp.bfloat16)
    b2p = jnp.pad(b2.astype(jnp.float32), (0, Wp_out - W)).reshape(1, Wp_out)
    # Labels: tiny (Bp, 1) int32 tile (padded rows discarded in the wrapper).
    labp = jnp.pad(label.astype(jnp.int32), (0, Bp - B)).reshape(Bp, 1)

    kernel = functools.partial(_loss_kernel, wt=wt, w_valid=W)

    per_ex = pl.pallas_call(
        kernel,
        out_shape=jax.ShapeDtypeStruct((Bp, 128), jnp.float32),
        grid=(n_bt, n_wt),                      # reduction (vocab) axis last
        in_specs=[
            pl.BlockSpec((bt, Wp_in), lambda i, j: (i, 0)),   # x
            pl.BlockSpec((Wp_in, Ep), lambda i, j: (0, 0)),   # w1.T (padded)
            pl.BlockSpec((1, Ep), lambda i, j: (0, 0)),       # b1
            pl.BlockSpec((Ep, wt), lambda i, j: (0, j)),      # w2.T tile
            pl.BlockSpec((1, wt), lambda i, j: (0, j)),       # b2 tile
            pl.BlockSpec((bt, 1), lambda i, j: (i, 0)),       # labels
        ],
        out_specs=pl.BlockSpec((bt, 128), lambda i, j: (i, 0)),
        scratch_shapes=[
            pltpu.VMEM((bt, Ep), jnp.float32),   # hidden activations
            pltpu.VMEM((bt, 1), jnp.float32),    # running max (m)
            pltpu.VMEM((bt, 1), jnp.float32),    # running sum (l)
            pltpu.VMEM((bt, 1), jnp.float32),    # picked label logit
        ],
        compiler_params=pltpu.CompilerParams(
            dimension_semantics=("parallel", "arbitrary"),
            vmem_limit_bytes=64 * 1024 * 1024,
        ),
        cost_estimate=pl.CostEstimate(
            flops=2 * Bp * Wp_in * Ep + 2 * Bp * Ep * Wp_out,
            transcendentals=Bp * Wp_out,
            bytes_accessed=(xp.size * 2 + w1t.size * 2 + w2t.size * 2
                            + b1p.size * 4 + b2p.size * 4 + labp.size * 4
                            + Bp * 128 * 4),
        ),
    )(xp, w1t, b1p, w2t, b2p, labp)

    # Mean over the real (un-padded) examples; padded rows are simply ignored.
    return jnp.sum(per_ex[:B, 0]) / B


# ------------------------------------------------------ reference (plain JAX)

def _ref_embed(x, w1, b1):
    return x @ w1.T + b1


def _ref_loss(x, label, w1, b1, w2, b2):
    h = x @ w1.T + b1
    logits = h @ w2.T + b2
    logp = jax.nn.log_softmax(logits, axis=-1)
    return -jnp.mean(logp[jnp.arange(x.shape[0]), label])


if __name__ == "__main__":
    batch = 8
    word_size = 128
    embedding_num = 32

    key = jax.random.PRNGKey(0)
    k1, k2, k3, k4, k5, k6 = jax.random.split(key, 6)

    # PyTorch-Linear-style uniform init bounds.
    bound1 = 1.0 / (word_size ** 0.5)
    bound2 = 1.0 / (embedding_num ** 0.5)
    w1 = jax.random.uniform(k1, (embedding_num, word_size), jnp.float32, -bound1, bound1)
    b1 = jax.random.uniform(k2, (embedding_num,), jnp.float32, -bound1, bound1)
    w2 = jax.random.uniform(k3, (word_size, embedding_num), jnp.float32, -bound2, bound2)
    b2 = jax.random.uniform(k4, (word_size,), jnp.float32, -bound2, bound2)

    x = jax.random.normal(k5, (batch, word_size), jnp.float32)
    label = jax.random.randint(k6, (batch,), 0, word_size, jnp.int32)

    # Branch 1: label=None -> embeddings.
    emb = jax.block_until_ready(word2vec_embed(x, w1, b1))
    emb_ref = _ref_embed(x, w1, b1)
    assert emb.shape == emb_ref.shape, "embedding shape mismatch"
    assert jnp.allclose(emb, emb_ref, atol=2e-2, rtol=2e-2), "embedding mismatch"

    # Branch 2: label provided -> scalar cross-entropy loss.
    loss = jax.block_until_ready(word2vec_loss(x, label, w1, b1, w2, b2))
    loss_ref = _ref_loss(x, label, w1, b1, w2, b2)
    assert jnp.allclose(loss, loss_ref, atol=5e-2, rtol=5e-2), "loss mismatch"

    print("KERNEL_OK")
</pallas_src>

<mosaic_0001>
module attributes {stable_mosaic.version = 11 : i64} {
  func.func @_embed_kernel(%arg0: i32, %arg1: memref<128x128xbf16, #tpu.memory_space<vmem>>, %arg2: memref<128x128xbf16, #tpu.memory_space<vmem>>, %arg3: memref<1x128xf32, #tpu.memory_space<vmem>>, %arg4: memref<128x128xf32, #tpu.memory_space<vmem>>) attributes {dimension_semantics = [#tpu.dimension_semantics<parallel>], iteration_bounds = array<i64: 1>, scalar_prefetch = 0 : i64, scratch_operands = 0 : i64, tpu.core_type = #tpu.core_type<tc>, window_params = [{transform_indices = @transform_0, window_bounds = array<i64: 128, 128>}, {pipeline_mode = #tpu.pipeline_mode<synchronous>, transform_indices = @transform_1, window_bounds = array<i64: 128, 128>}, {pipeline_mode = #tpu.pipeline_mode<synchronous>, transform_indices = @transform_2, window_bounds = array<i64: 1, 128>}, {transform_indices = @transform_3, window_bounds = array<i64: 128, 128>}]} {
    %c0 = arith.constant 0 : index
    %c0_0 = arith.constant 0 : index
    %0 = vector.load %arg1[%c0, %c0_0] : memref<128x128xbf16, #tpu.memory_space<vmem>>, vector<128x128xbf16>
    %c0_1 = arith.constant 0 : index
    %c0_2 = arith.constant 0 : index
    %1 = vector.load %arg2[%c0_1, %c0_2] : memref<128x128xbf16, #tpu.memory_space<vmem>>, vector<128x128xbf16>
    %cst = arith.constant dense<0.000000e+00> : vector<128x128xf32>
    %2 = tpu.matmul %0, %1, %cst {dimension_numbers = #tpu.dot_dimension_numbers<[1], [0], [0], [1], [0, 0, 1, 1], [], []>} : vector<128x128xbf16>, vector<128x128xbf16>, vector<128x128xf32> -> vector<128x128xf32>
    %c0_3 = arith.constant 0 : index
    %c0_4 = arith.constant 0 : index
    %3 = vector.load %arg3[%c0_3, %c0_4] : memref<1x128xf32, #tpu.memory_space<vmem>>, vector<1x128xf32>
    %4 = vector.broadcast %3 : vector<1x128xf32> to vector<128x128xf32>
    %5 = arith.addf %2, %4 : vector<128x128xf32>
    %c0_5 = arith.constant 0 : index
    %c0_6 = arith.constant 0 : index
    %6 = vector.load %arg4[%c0_5, %c0_6] : memref<128x128xf32, #tpu.memory_space<vmem>>, vector<128x128xf32>
    tpu.vector_store %arg4[%c0_5, %c0_6], %5 {strides = array<i32>} : memref<128x128xf32, #tpu.memory_space<vmem>>, vector<128x128xf32>,
    return
  }
  func.func @transform_0(%arg0: i32) -> (i32, i32) {
    %c0_i32 = arith.constant 0 : i32
    %c0_i32_0 = arith.constant 0 : i32
    return %arg0, %c0_i32 : i32, i32
  }
  func.func @transform_1(%arg0: i32) -> (i32, i32) {
    %c0_i32 = arith.constant 0 : i32
    %c0_i32_0 = arith.constant 0 : i32
    %c0_i32_1 = arith.constant 0 : i32
    return %c0_i32, %c0_i32_0 : i32, i32
  }
  func.func @transform_2(%arg0: i32) -> (i32, i32) {
    %c0_i32 = arith.constant 0 : i32
    %c0_i32_0 = arith.constant 0 : i32
    %c0_i32_1 = arith.constant 0 : i32
    return %c0_i32, %c0_i32_0 : i32, i32
  }
  func.func @transform_3(%arg0: i32) -> (i32, i32) {
    %c0_i32 = arith.constant 0 : i32
    %c0_i32_0 = arith.constant 0 : i32
    return %arg0, %c0_i32 : i32, i32
  }
}

</mosaic_0001>

<llo_original>
// kernel: tpu_custom_call.1
$region0: #{tpu_custom_call.1}
  #allocation0 [shape = 'u32[]', space=smem, size = 0x4, offset = 0x4, fixed_abs, tag = 'smem constant byte address 0x4 - core index']
  #allocation1 [shape = 'u32[144,128]{1,0:T(1,128)}', space=vmem, size = 0x12000, scoped, tag = 'internal scratch']
  %s0 = inlined_call_operand.hbm [shape: bf16[128,128], index: 0, kind: input, shape index: {}]
  %s1 = inlined_call_operand.hbm [shape: bf16[128,128], index: 1, kind: input, shape index: {}]
  %s2 = inlined_call_operand.vmem [shape: f32[1,128], index: 2, kind: input, shape index: {}]
  %s3 = inlined_call_operand.hbm [shape: f32[128,128], index: 3, kind: output, shape index: {}]
  %s4 = sld [smem:[#allocation0]]
  $region30: #{tpu_custom_call.1} parent=0
    _
  %s6 = ssub.s32 1, %s4
  %s7 = scalar_select 0, %s6, %s4
  $region1: #{tpu_custom_call.1} parent=0
    #allocation2 [shape = 'u8[32768]{0}', space=vmem, size = 0x8000, scoped, tag = 'input window, operand 0, single buffered']
    #allocation3 [shape = 's32[1]{0}', space=sflag, size = 0x4, scoped, tag = 'scoped memory for tpu_custom_call.1']
    #allocation4 [shape = 's32[1]{0}', space=sflag, size = 0x4, scoped, tag = 'scoped memory for tpu_custom_call.1']
    #allocation5 [shape = 'u8[32768]{0}', space=vmem, size = 0x8000, scoped, tag = 'input window, operand 1, single buffered']
    #allocation6 [shape = 's32[1]{0}', space=sflag, size = 0x4, scoped, tag = 'scoped memory for tpu_custom_call.1']
    #allocation7 [shape = 'u8[65536]{0}', space=vmem, size = 0x10000, scoped, tag = 'output window, operand 0, single buffered']
    %8 = vsyncpa [#allocation3], 0
    %9 = vsyncpa [#allocation6], 0
    %10 = vsyncpa [#allocation4], 0
    // Predicated region
    $region2: #{tpu_custom_call.1} parent=1 // pred_check
      _
    $region3: #{tpu_custom_call.1} parent=1 // pred_check_branch
      %12 = sbr.rel (0) target = $region5
    $region4: #{tpu_custom_call.1} parent=1 // pred_region
      %s14 = ssub.s32 1024, 1024
      %15 = vsyncadd [#allocation3], %s14
      %s16 = sshll.u32 [#allocation2], 4
      %s17 = int_to_ptr.vmem [resolvable:$true] %s16
      %22 = dma.hbm_to_vmem [thread:$0]  %s0, 1024, %s17, [#allocation3], 64, 64, 4
    $region5: #{tpu_custom_call.1} parent=1 // pred_fallthru
      _
    // Predicated region
    $region6: #{tpu_custom_call.1} parent=1 // pred_check
      _
    $region7: #{tpu_custom_call.1} parent=1 // pred_check_branch
      %24 = sbr.rel (0) target = $region9
    $region8: #{tpu_custom_call.1} parent=1 // pred_region
      %s26 = ssub.s32 1024, 1024
      %27 = vsyncadd [#allocation6], %s26
      %s28 = sshll.u32 [#allocation5], 4
      %s29 = int_to_ptr.vmem [resolvable:$true] %s28
      %34 = dma.hbm_to_vmem [thread:$0]  %s1, 1024, %s29, [#allocation6], 64, 64, 4
    $region9: #{tpu_custom_call.1} parent=1 // pred_fallthru
      _
    // Predicated region
    $region10: #{tpu_custom_call.1} parent=1 // pred_check
      _
    $region11: #{tpu_custom_call.1} parent=1 // pred_check_branch
      %36 = sbr.rel (0) target = $region13
    $region12: #{tpu_custom_call.1} parent=1 // pred_region
      _
    $region13: #{tpu_custom_call.1} parent=1 // pred_fallthru
      _
    // Predicated region
    $region14: #{tpu_custom_call.1} parent=1 // pred_check
      _
    $region15: #{tpu_custom_call.1} parent=1 // pred_check_branch
      %38 = sbr.rel (0) target = $region17
    $region16: #{tpu_custom_call.1} parent=1 // pred_region
      %39 = dma.done [#allocation3], 1024
    $region17: #{tpu_custom_call.1} parent=1 // pred_fallthru
      _
    // Predicated region
    $region18: #{tpu_custom_call.1} parent=1 // pred_check
      _
    $region19: #{tpu_custom_call.1} parent=1 // pred_check_branch
      %41 = sbr.rel (0) target = $region21
    $region20: #{tpu_custom_call.1} parent=1 // pred_region
      %42 = dma.done [#allocation6], 1024
    $region21: #{tpu_custom_call.1} parent=1 // pred_fallthru
      _
    %v44 = vld [vmem:[#allocation2] sm:$0xf]
    %v45 = vld [vmem:[#allocation2 + $0x4] sm:$0xf]
    %v46 = vld [vmem:[#allocation2 + $0x8] sm:$0xf]
    %v47 = vld [vmem:[#allocation2 + $0xc] sm:$0xf]
    %v48 = vld [vmem:[#allocation2 + $0x10] sm:$0xf]
    %v49 = vld [vmem:[#allocation2 + $0x14] sm:$0xf]
    %v50 = vld [vmem:[#allocation2 + $0x18] sm:$0xf]
    %v51 = vld [vmem:[#allocation2 + $0x1c] sm:$0xf]
    %v52 = vld [vmem:[#allocation2 + $0x20] sm:$0xf]
    %v53 = vld [vmem:[#allocation2 + $0x24] sm:$0xf]
    %v54 = vld [vmem:[#allocation2 + $0x28] sm:$0xf]
    %v55 = vld [vmem:[#allocation2 + $0x2c] sm:$0xf]
    %v56 = vld [vmem:[#allocation2 + $0x30] sm:$0xf]
    %v57 = vld [vmem:[#allocation2 + $0x34] sm:$0xf]
    %v58 = vld [vmem:[#allocation2 + $0x38] sm:$0xf]
    %v59 = vld [vmem:[#allocation2 + $0x3c] sm:$0xf]
    %v60 = vld [vmem:[#allocation5] sm:$0xf]
    %v61 = vld [vmem:[#allocation5 + $0x4] sm:$0xf]
    %v62 = vld [vmem:[#allocation5 + $0x8] sm:$0xf]
    %v63 = vld [vmem:[#allocation5 + $0xc] sm:$0xf]
    %v64 = vld [vmem:[#allocation5 + $0x10] sm:$0xf]
    %v65 = vld [vmem:[#allocation5 + $0x14] sm:$0xf]
    %v66 = vld [vmem:[#allocation5 + $0x18] sm:$0xf]
    %v67 = vld [vmem:[#allocation5 + $0x1c] sm:$0xf]
    %v68 = vld [vmem:[#allocation5 + $0x20] sm:$0xf]
    %v69 = vld [vmem:[#allocation5 + $0x24] sm:$0xf]
    %v70 = vld [vmem:[#allocation5 + $0x28] sm:$0xf]
    %v71 = vld [vmem:[#allocation5 + $0x2c] sm:$0xf]
    %v72 = vld [vmem:[#allocation5 + $0x30] sm:$0xf]
    %v73 = vld [vmem:[#allocation5 + $0x34] sm:$0xf]
    %v74 = vld [vmem:[#allocation5 + $0x38] sm:$0xf]
    %v75 = vld [vmem:[#allocation5 + $0x3c] sm:$0xf]
    %v76 = vld [vmem:[%s2] sm:$0x1]
    %v78 = vlaneseq
    %v79 = vshrl.u32 %v78, 7
    %v80 = vsub.s32 0, %v79
    %v81 = vrot.slane %v76, %v80
    %v99 = vunpack.c.l.b16 %v44
    %v100 = vunpack.c.l.b16 %v45
    %v101 = vunpack.c.l.b16 %v46
    %v102 = vunpack.c.l.b16 %v47
    %v103 = vunpack.c.l.b16 %v48
    %v104 = vunpack.c.l.b16 %v49
    %v105 = vunpack.c.l.b16 %v50
    %v106 = vunpack.c.l.b16 %v51
    %v107 = vunpack.c.l.b16 %v52
    %v108 = vunpack.c.l.b16 %v53
    %v109 = vunpack.c.l.b16 %v54
    %v110 = vunpack.c.l.b16 %v55
    %v111 = vunpack.c.l.b16 %v56
    %v112 = vunpack.c.l.b16 %v57
    %v113 = vunpack.c.l.b16 %v58
    %v114 = vunpack.c.l.b16 %v59
    %v115 = vpack.c.b16 %v100, %v99
    %v116 = vpack.c.b16 %v102, %v101
    %v117 = vpack.c.b16 %v104, %v103
    %v118 = vpack.c.b16 %v106, %v105
    %v119 = vpack.c.b16 %v108, %v107
    %v120 = vpack.c.b16 %v110, %v109
    %v121 = vpack.c.b16 %v112, %v111
    %v122 = vpack.c.b16 %v114, %v113
    %v147 = vunpack.c.l.b16 %v60
    %v148 = vunpack.c.l.b16 %v61
    %v149 = vunpack.c.l.b16 %v62
    %v150 = vunpack.c.l.b16 %v63
    %v151 = vunpack.c.l.b16 %v64
    %v152 = vunpack.c.l.b16 %v65
    %v153 = vunpack.c.l.b16 %v66
    %v154 = vunpack.c.l.b16 %v67
    %v155 = vunpack.c.l.b16 %v68
    %v156 = vunpack.c.l.b16 %v69
    %v157 = vunpack.c.l.b16 %v70
    %v158 = vunpack.c.l.b16 %v71
    %v159 = vunpack.c.l.b16 %v72
    %v160 = vunpack.c.l.b16 %v73
    %v161 = vunpack.c.l.b16 %v74
    %v162 = vunpack.c.l.b16 %v75
    %v163 = vpack.c.b16 %v148, %v147
    %v164 = vpack.c.b16 %v150, %v149
    %v165 = vpack.c.b16 %v152, %v151
    %v166 = vpack.c.b16 %v154, %v153
    %v167 = vpack.c.b16 %v156, %v155
    %v168 = vpack.c.b16 %v158, %v157
    %v169 = vpack.c.b16 %v160, %v159
    %v170 = vpack.c.b16 %v162, %v161
    %179 = vmatprep.subr.bf16.mxu0 0
    %180 = vmatpush1.bf16.msra.mxu0 %v170
    %181 = vmatprep.subr.bf16.mxu0 0
    %182 = vmatpush1.bf16.msra.mxu0 %v169
    %183 = vmatprep.subr.bf16.mxu0 0
    %184 = vmatpush1.bf16.msra.mxu0 %v168
    %185 = vmatprep.subr.bf16.mxu0 0
    %186 = vmatpush1.bf16.msra.mxu0 %v167
    %187 = vmatprep.subr.bf16.mxu0 0
    %188 = vmatpush1.bf16.msra.mxu0 %v166
    %189 = vmatprep.subr.bf16.mxu0 0
    %190 = vmatpush1.bf16.msra.mxu0 %v165
    %191 = vmatprep.subr.bf16.mxu0 0
    %192 = vmatpush1.bf16.msra.mxu0 %v164
    %193 = vmatprep.subr.bf16.mxu0 0
    %194 = vmatpush1.bf16.msra.mxu0 %v163
    %195 = vmatprep.subr.bf16.mxu0 0
    %196 = vmatpush2.bf16.msra.mxu0 0
    %197 = vmatprep.subr.bf16.mxu0 0
    %198 = vmatpush2.bf16.msra.mxu0 0
    %199 = vmatprep.subr.bf16.mxu0 0
    %200 = vmatpush2.bf16.msra.mxu0 0
    %201 = vmatprep.subr.bf16.mxu0 0
    %202 = vmatpush2.bf16.msra.mxu0 0
    %203 = vmatprep.subr.bf16.mxu0 0
    %204 = vmatpush2.bf16.msra.mxu0 0
    %205 = vmatprep.subr.bf16.mxu0 0
    %206 = vmatpush2.bf16.msra.mxu0 0
    %207 = vmatprep.subr.bf16.mxu0 0
    %208 = vmatpush2.bf16.msra.mxu0 0
    %209 = vmatprep.subr.bf16.mxu0 0
    %210 = vmatpush2.bf16.msra.mxu0 0
    %211 = vmatprep.mubr.bf16.mxu0 0
    %212 = vmatmul.mubr.bf16.gmra.mxu0 %v115
    %v213 = vpop.f32.mrf.mxu0
    %v214 = vadd.f32 %v81, %v213
    %v215 = vpop.f32.mrf.mxu0
    %v216 = vpop.f32.mrf.mxu0
    %v217 = vadd.f32 %v81, %v216
    %v218 = vpop.f32.mrf.mxu0
    %219 = vmatprep.mubr.bf16.mxu0 0
    %220 = vmatmul.mubr.bf16.gmra.mxu0 %v116
    %v221 = vpop.f32.mrf.mxu0
    %v222 = vadd.f32 %v81, %v221
    %v223 = vpop.f32.mrf.mxu0
    %v224 = vpop.f32.mrf.mxu0
    %v225 = vadd.f32 %v81, %v224
    %v226 = vpop.f32.mrf.mxu0
    %227 = vmatprep.mubr.bf16.mxu0 0
    %228 = vmatmul.mubr.bf16.gmra.mxu0 %v117
    %v229 = vpop.f32.mrf.mxu0
    %v230 = vadd.f32 %v81, %v229
    %v231 = vpop.f32.mrf.mxu0
    %v232 = vpop.f32.mrf.mxu0
    %v233 = vadd.f32 %v81, %v232
    %v234 = vpop.f32.mrf.mxu0
    %235 = vmatprep.mubr.bf16.mxu0 0
    %236 = vmatmul.mubr.bf16.gmra.mxu0 %v118
    %v237 = vpop.f32.mrf.mxu0
    %v238 = vadd.f32 %v81, %v237
    %v239 = vpop.f32.mrf.mxu0
    %v240 = vpop.f32.mrf.mxu0
    %v241 = vadd.f32 %v81, %v240
    %v242 = vpop.f32.mrf.mxu0
    %243 = vmatprep.mubr.bf16.mxu0 0
    %244 = vmatmul.mubr.bf16.gmra.mxu0 %v119
    %v245 = vpop.f32.mrf.mxu0
    %v246 = vadd.f32 %v81, %v245
    %v247 = vpop.f32.mrf.mxu0
    %v248 = vpop.f32.mrf.mxu0
    %v249 = vadd.f32 %v81, %v248
    %v250 = vpop.f32.mrf.mxu0
    %251 = vmatprep.mubr.bf16.mxu0 0
    %252 = vmatmul.mubr.bf16.gmra.mxu0 %v120
    %v253 = vpop.f32.mrf.mxu0
    %v254 = vadd.f32 %v81, %v253
    %v255 = vpop.f32.mrf.mxu0
    %v256 = vpop.f32.mrf.mxu0
    %v257 = vadd.f32 %v81, %v256
    %v258 = vpop.f32.mrf.mxu0
    %259 = vmatprep.mubr.bf16.mxu0 0
    %260 = vmatmul.mubr.bf16.gmra.mxu0 %v121
    %v261 = vpop.f32.mrf.mxu0
    %v262 = vadd.f32 %v81, %v261
    %v263 = vpop.f32.mrf.mxu0
    %v264 = vpop.f32.mrf.mxu0
    %v265 = vadd.f32 %v81, %v264
    %v266 = vpop.f32.mrf.mxu0
    %267 = vmatprep.mubr.bf16.mxu0 0
    %268 = vmatmul.mubr.bf16.gmra.mxu0 %v122
    %v269 = vpop.f32.mrf.mxu0
    %v270 = vadd.f32 %v81, %v269
    %v271 = vpop.f32.mrf.mxu0
    %v272 = vpop.f32.mrf.mxu0
    %v273 = vadd.f32 %v81, %v272
    %v274 = vpop.f32.mrf.mxu0
    %275 = vdwg.mxu0
    %276 = vst [vmem:[#allocation7] sm:$0xff] %v214
    %277 = vst [vmem:[#allocation7 + $0x8] sm:$0xff] %v217
    %278 = vst [vmem:[#allocation7 + $0x10] sm:$0xff] %v222
    %279 = vst [vmem:[#allocation7 + $0x18] sm:$0xff] %v225
    %280 = vst [vmem:[#allocation7 + $0x20] sm:$0xff] %v230
    %281 = vst [vmem:[#allocation7 + $0x28] sm:$0xff] %v233
    %282 = vst [vmem:[#allocation7 + $0x30] sm:$0xff] %v238
    %283 = vst [vmem:[#allocation7 + $0x38] sm:$0xff] %v241
    %284 = vst [vmem:[#allocation7 + $0x40] sm:$0xff] %v246
    %285 = vst [vmem:[#allocation7 + $0x48] sm:$0xff] %v249
    %286 = vst [vmem:[#allocation7 + $0x50] sm:$0xff] %v254
    %287 = vst [vmem:[#allocation7 + $0x58] sm:$0xff] %v257
    %288 = vst [vmem:[#allocation7 + $0x60] sm:$0xff] %v262
    %289 = vst [vmem:[#allocation7 + $0x68] sm:$0xff] %v265
    %290 = vst [vmem:[#allocation7 + $0x70] sm:$0xff] %v270
    %291 = vst [vmem:[#allocation7 + $0x78] sm:$0xff] %v273
    // Predicated region
    $region22: #{tpu_custom_call.1} parent=1 // pred_check
      _
    $region23: #{tpu_custom_call.1} parent=1 // pred_check_branch
      %293 = sbr.rel (0) target = $region25
    $region24: #{tpu_custom_call.1} parent=1 // pred_region
      %s295 = ssub.s32 2048, 2048
      %296 = vsyncadd [#allocation4], %s295
      %s297 = sshll.u32 [#allocation7], 4
      %s298 = int_to_ptr.vmem [resolvable:$true] %s297
      %303 = dma.vmem_to_hbm [thread:$0]  %s298, 2048, %s3, [#allocation4], 128, 128, 8
    $region25: #{tpu_custom_call.1} parent=1 // pred_fallthru
      _
    // Predicated region
    $region26: #{tpu_custom_call.1} parent=1 // pred_check
      _
    $region27: #{tpu_custom_call.1} parent=1 // pred_check_branch
      %305 = sbr.rel (0) target = $region29
    $region28: #{tpu_custom_call.1} parent=1 // pred_region
      %306 = dma.done [#allocation4], 2048
    $region29: #{tpu_custom_call.1} parent=1 // pred_fallthru
      _
    %307 = vsyncpa [#allocation3], 1
    %308 = vsyncpa [#allocation6], 1
    %309 = vsyncpa [#allocation4], 1

</llo_original>
